<compile_context>
chip_gen: v7x
topology: tpu7x:2x2x1
jax: 0.10.0
libtpu: 0.0.40
codegen_flags: <defaults>
</compile_context>

<pallas_src>
import jax
import jax.numpy as jnp
from jax.experimental import pallas as pl
from jax.experimental.pallas import tpu as pltpu


def _cdiv(a: int, b: int) -> int:
    return -(-a // b)


def _round_up(v: int, m: int) -> int:
    return _cdiv(v, m) * m


# --------------------------------------------------------------------------
# Kernels
# --------------------------------------------------------------------------
def _vector_norm_kernel(x_ref, o_ref):
    # x_ref: (BN, C, BHW); o_ref: (BN, BHW).  Whole C inside the block.
    x = x_ref[...]
    if x.dtype != jnp.float32:
        x = x.astype(jnp.float32)  # accumulate in f32 (bf16 inputs)
    # sqrt lands on the EUP slot -> free relative to the HBM read bottleneck.
    o_ref[...] = jnp.sqrt(jnp.sum(x * x, axis=1)).astype(o_ref.dtype)


def _make_c_tiled_kernel(c_total: int, bc: int):
    """L2-norm kernel with C tiled on the trailing ('arbitrary') grid axis."""

    def kernel(x_ref, o_ref, acc_ref):
        k = pl.program_id(2)

        @pl.when(k == 0)
        def _():
            acc_ref[...] = jnp.zeros_like(acc_ref)

        x = x_ref[...].astype(jnp.float32)
        if c_total % bc != 0:
            # Mask the out-of-bounds channels of the (partial) last C block so
            # undefined VMEM contents never mix into valid sums.
            c_idx = jax.lax.broadcasted_iota(jnp.int32, x.shape, 1) + k * bc
            x = jnp.where(c_idx < c_total, x, 0.0)
        acc_ref[...] += jnp.sum(x * x, axis=1)

        @pl.when(k == pl.num_programs(2) - 1)
        def _():
            o_ref[...] = jnp.sqrt(acc_ref[...]).astype(o_ref.dtype)

    return kernel


# --------------------------------------------------------------------------
# Tile / VMEM budgeting
# --------------------------------------------------------------------------
def _vmem_budget():
    """Returns (pipelined_tile_budget_bytes, vmem_limit_bytes, two_core_hint)."""
    try:
        cap = int(pltpu.get_tpu_info().vmem_capacity_bytes)
    except Exception:
        cap = 64 << 20  # conservative (v7x-sized) fallback; safe everywhere
    if cap <= (64 << 20):
        # v7x: 64 MiB physical per TC, 2 TCs per chip -> leave headroom.
        return 22 << 20, 44 << 20, True
    # v5e / v6e: 128 MiB physical VMEM, single TC -> use much larger tiles.
    return 56 << 20, 96 << 20, False


def _choose_tiles(n, c, hw, itemsize, budget, force_c_tiling):
    """Pick (bn, bc, bhw, tile_c) honouring sublane-padded VMEM accounting."""
    sublane = {4: 8, 2: 16, 1: 32}.get(itemsize, 8)
    c_pad = _round_up(c, sublane)  # real VMEM footprint pads C to a sublane group

    def needed(bn_, bc_, bhw_, with_acc):
        in_b = bn_ * bc_ * bhw_ * itemsize
        out_b = bn_ * bhw_ * itemsize
        acc_b = bn_ * bhw_ * 4 if with_acc else 0
        return 2 * (in_b + out_b) + acc_b  # 2x: double-buffered pipeline

    # Large lane tiles (512-2048) regardless of HW divisibility; grow bn for
    # large N so per-step DMAs are several MiB.
    bhw = min(_round_up(hw, 128), 2048)
    bn = min(_round_up(n, sublane), 64)

    tile_c = bool(force_c_tiling)
    bc = c
    if not tile_c:
        # Shrink N tile first (keep lanes wide), then lanes, floor at 512.
        while needed(bn, c_pad, bhw, False) > budget and bn > sublane:
            bn = max(sublane, _round_up(bn // 2, sublane))
        while needed(bn, c_pad, bhw, False) > budget and bhw > 512:
            bhw = max(512, _round_up(bhw // 2, 128))
        if needed(bn, c_pad, bhw, False) > budget:
            tile_c = True  # C is what blows the budget: tile it, keep lanes wide

    if tile_c:
        bn = min(_round_up(n, sublane), 64)
        bhw = min(_round_up(hw, 128), 2048)
        bc = sublane
        while (bc * 2 <= c_pad) and needed(bn, bc * 2, bhw, True) <= budget:
            bc *= 2
        while needed(bn, bc, bhw, True) > budget and bn > sublane:
            bn = max(sublane, _round_up(bn // 2, sublane))
        while needed(bn, bc, bhw, True) > budget and bhw > 128:
            bhw = max(128, _round_up(bhw // 2, 128))

    return bn, bc, bhw, tile_c


# --------------------------------------------------------------------------
# Wrapper
# --------------------------------------------------------------------------
def vector_norm_dim1(x: jax.Array, *, force_c_tiling: bool = False) -> jax.Array:
    """Equivalent of torch.linalg.vector_norm(x, dim=1, keepdim=False), ord=2.

    x: (N, C, H, W) float (f32 or bf16); returns (N, H, W) in x.dtype.
    """
    n, c, h, w = x.shape
    hw = h * w
    x3 = x.reshape(n, c, hw)  # free: contiguous view, no HBM round-trip
    itemsize = jnp.dtype(x.dtype).itemsize

    budget, vmem_limit, two_cores = _vmem_budget()
    bn, bc, bhw, tile_c = _choose_tiles(n, c, hw, itemsize, budget, force_c_tiling)

    grid_n = _cdiv(n, bn)
    grid_hw = _cdiv(hw, bhw)
    # v7x has 2 TensorCores: avoid a degenerate single-block grid when HW can
    # be split at lane granularity so both cores receive work.
    if two_cores and grid_n * grid_hw == 1 and hw > 128:
        bhw = max(128, _round_up(_cdiv(hw, 2), 128))
        grid_hw = _cdiv(hw, bhw)

    compiler_params_2d = pltpu.CompilerParams(
        dimension_semantics=("parallel", "parallel"),
        vmem_limit_bytes=int(vmem_limit),
    )
    compiler_params_3d = pltpu.CompilerParams(
        dimension_semantics=("parallel", "parallel", "arbitrary"),
        vmem_limit_bytes=int(vmem_limit),
    )

    if not tile_c:
        out = pl.pallas_call(
            _vector_norm_kernel,
            out_shape=jax.ShapeDtypeStruct((n, hw), x.dtype),
            grid=(grid_n, grid_hw),
            in_specs=[
                pl.BlockSpec(
                    (bn, c, bhw),
                    lambda i, j: (i, 0, j),
                    memory_space=pltpu.MemorySpace.VMEM,
                )
            ],
            out_specs=pl.BlockSpec(
                (bn, bhw),
                lambda i, j: (i, j),
                memory_space=pltpu.MemorySpace.VMEM,
            ),
            compiler_params=compiler_params_2d,
        )(x3)
    else:
        grid_c = _cdiv(c, bc)
        out = pl.pallas_call(
            _make_c_tiled_kernel(c, bc),
            out_shape=jax.ShapeDtypeStruct((n, hw), x.dtype),
            grid=(grid_n, grid_hw, grid_c),
            in_specs=[
                pl.BlockSpec(
                    (bn, bc, bhw),
                    lambda i, j, k: (i, k, j),
                    memory_space=pltpu.MemorySpace.VMEM,
                )
            ],
            out_specs=pl.BlockSpec(
                (bn, bhw),
                lambda i, j, k: (i, j),
                memory_space=pltpu.MemorySpace.VMEM,
            ),
            scratch_shapes=[pltpu.VMEM((bn, bhw), jnp.float32)],
            compiler_params=compiler_params_3d,
        )(x3)

    # No un-padding slice needed: out_shape is exactly (n, hw).
    return out.reshape(n, h, w)


if __name__ == "__main__":
    key = jax.random.PRNGKey(0)

    # Main shape implied by the module (reduction over dim=1 of NCHW).
    x = jax.random.normal(key, (2, 4, 16, 16), dtype=jnp.float32)
    y = jax.block_until_ready(vector_norm_dim1(x))
    y_ref = jnp.sqrt(jnp.sum(x * x, axis=1))
    assert y.shape == (2, 16, 16)
    assert jnp.allclose(y, y_ref, atol=1e-5, rtol=1e-5)

    # Non-aligned shape: exercises the cdiv grid / partial edge blocks with no
    # jnp.pad pre-pass (N not a multiple of 8, HW not a multiple of 128).
    x2 = jax.random.normal(jax.random.PRNGKey(1), (3, 5, 5, 7), dtype=jnp.float32)
    y2 = jax.block_until_ready(vector_norm_dim1(x2))
    y2_ref = jnp.sqrt(jnp.sum(x2 * x2, axis=1))
    assert y2.shape == (3, 5, 7)
    assert jnp.allclose(y2, y2_ref, atol=1e-5, rtol=1e-5)

    # Exercise the C-tiled (accumulator) path, including the masked partial
    # last C block, at a small shape by forcing it on.
    x3 = jax.random.normal(jax.random.PRNGKey(2), (2, 20, 8, 16), dtype=jnp.float32)
    y3 = jax.block_until_ready(vector_norm_dim1(x3, force_c_tiling=True))
    y3_ref = jnp.sqrt(jnp.sum(x3 * x3, axis=1))
    assert y3.shape == (2, 8, 16)
    assert jnp.allclose(y3, y3_ref, atol=1e-5, rtol=1e-5)

    print("KERNEL_OK")
</pallas_src>

<mosaic_0001>
module attributes {stable_mosaic.version = 11 : i64} {
  func.func @_vector_norm_kernel(%arg0: i32, %arg1: i32, %arg2: memref<8x4x128xf32, #tpu.memory_space<vmem>>, %arg3: memref<8x128xf32, #tpu.memory_space<vmem>>) attributes {dimension_semantics = [#tpu.dimension_semantics<parallel>, #tpu.dimension_semantics<parallel>], iteration_bounds = array<i64: 1, 2>, scalar_prefetch = 0 : i64, scratch_operands = 0 : i64, tpu.core_type = #tpu.core_type<tc>, window_params = [{transform_indices = @transform_0, window_bounds = array<i64: 8, 4, 128>}, {transform_indices = @transform_1, window_bounds = array<i64: 8, 128>}]} {
    %c0 = arith.constant 0 : index
    %c0_0 = arith.constant 0 : index
    %c0_1 = arith.constant 0 : index
    %0 = vector.load %arg2[%c0, %c0_0, %c0_1] : memref<8x4x128xf32, #tpu.memory_space<vmem>>, vector<8x4x128xf32>
    %1 = arith.mulf %0, %0 : vector<8x4x128xf32>
    %cst = arith.constant dense<0.000000e+00> : vector<8x128xf32>
    %2 = vector.multi_reduction <add>, %1, %cst [1] : vector<8x4x128xf32> to vector<8x128xf32>
    %3 = math.sqrt %2 : vector<8x128xf32>
    %c0_2 = arith.constant 0 : index
    %c0_3 = arith.constant 0 : index
    %4 = vector.load %arg3[%c0_2, %c0_3] : memref<8x128xf32, #tpu.memory_space<vmem>>, vector<8x128xf32>
    tpu.vector_store %arg3[%c0_2, %c0_3], %3 {strides = array<i32>} : memref<8x128xf32, #tpu.memory_space<vmem>>, vector<8x128xf32>,
    return
  }
  func.func @transform_0(%arg0: i32, %arg1: i32) -> (i32, i32, i32) {
    %c0_i32 = arith.constant 0 : i32
    %c0_i32_0 = arith.constant 0 : i32
    return %arg0, %c0_i32, %arg1 : i32, i32, i32
  }
  func.func @transform_1(%arg0: i32, %arg1: i32) -> (i32, i32) {
    %c0_i32 = arith.constant 0 : i32
    return %arg0, %arg1 : i32, i32
  }
}

</mosaic_0001>

<llo_original>
// kernel: tpu_custom_call.1
$region0: #{tpu_custom_call.1}
  #allocation0 [shape = 'u32[]', space=smem, size = 0x4, offset = 0x4, fixed_abs, tag = 'smem constant byte address 0x4 - core index']
  #allocation1 [shape = 'u32[144,128]{1,0:T(1,128)}', space=vmem, size = 0x12000, scoped, tag = 'internal scratch']
  %s0 = inlined_call_operand.hbm [shape: f32[2,4,256], index: 0, kind: input, shape index: {}]
  %s1 = inlined_call_operand.hbm [shape: f32[2,256], index: 1, kind: output, shape index: {}]
  %s2 = sld [smem:[#allocation0]]
  $region41: #{tpu_custom_call.1} parent=0
    _
  %s4 = ssub.s32 1, %s2
  %s5 = scalar_select 0, %s4, %s2
  $region1: #{tpu_custom_call.1} parent=0
    #allocation2 [shape = 'u8[32768]{0}', space=vmem, size = 0x8000, scoped, tag = 'input window, operand 0']
    #allocation3 [shape = 's32[2]{0}', space=sflag, size = 0x8, scoped, tag = 'scoped memory for tpu_custom_call.1']
    #allocation4 [shape = 's32[2]{0}', space=sflag, size = 0x8, scoped, tag = 'scoped memory for tpu_custom_call.1']
    #allocation5 [shape = 'u8[8192]{0}', space=vmem, size = 0x2000, scoped, tag = 'output window, operand 0']
    %6 = vsyncpa [#allocation3], 0
    %s7 = scalar_lea.sflag [#allocation3], 1
    %8 = vsyncpa %s7, 0
    %9 = vsyncpa [#allocation4], 0
    %s10 = scalar_lea.sflag [#allocation4], 1
    %11 = vsyncpa %s10, 0
    loop: start=0, step=1, limit=4
    $region2: #{tpu_custom_call.1} parent=1 // loop_pre_header
      _
    $region3: #{tpu_custom_call.1} parent=1 // loop_header
      %s13 = sphi 0, %s17
      %p14 = scmp.ge.s32.totalorder %s13, 4
      %s20 = sphi 0, %s32
      %s21 = sphi 0, %s28
      %s22 = sphi 0, %s20
      %s23 = sphi 0, %s21
      %s24 = sphi 0, %s22
      %s25 = sphi 0, %s23
      %s37 = sphi 0, %s39
      %s40 = sphi 0, %s37
      %s41 = sphi 0, %s40
      %s57 = sphi 0, %s41
      %s65 = sphi 0, %s67
      %s68 = sphi 0, %s65
      %s69 = sphi 0, %s68
      %s85 = sphi 0, %s69
    $region4: #{tpu_custom_call.1} parent=1 // loop_header_branch
      %16 = sbr.rel (%p14) target = $region8
    $region5: #{tpu_custom_call.1} parent=1 // loop_body
      %s18 = ssub.s32 %s13, 1
      %s19 = ssub.s32 %s13, 2
      %s26 = sadd.s32 1, %s21
      %p27 = scmp.ge.s32.totalorder %s26, 2
      %s28 = scalar_select %p27, 0, %s26
      %s29 = sadd.s32 1, %s20
      %s30 = scalar_select %p27, %s29, %s20
      %p31 = scmp.ge.s32.totalorder %s30, 1
      %s32 = scalar_select %p31, 0, %s30
      %s33 = ssub.s32 %s20, %s32
      %s34 = ssub.s32 %s21, %s28
      %s35 = sor.u32 %s33, %s34
      %p36 = scmp.eq.s32.totalorder %s35, 0
      %s38 = sadd.s32 %s37, 1
      %s39 = scalar_select %p36, %s37, %s38
      %p42 = pneg %p36
      %p43 = scmp.eq.s32.totalorder %s13, 1
      %p44 = por %p42, %p43
      %p45 = scmp.ne.s32.totalorder %s37, %s40
      %p46 = scmp.eq.s32.totalorder %s13, 0
      %p47 = por %p45, %p46
      %p48 = scmp.ne.s32.totalorder %s37, %s40
      %p49 = scmp.eq.s32.totalorder %s18, 1
      %p50 = por %p48, %p49
      %p51 = scmp.ne.s32.totalorder %s40, %s41
      %p52 = scmp.eq.s32.totalorder %s18, 0
      %p53 = por %p51, %p52
      %p54 = scmp.ne.s32.totalorder %s40, %s41
      %p55 = scmp.eq.s32.totalorder %s19, 1
      %p56 = por %p54, %p55
      %p58 = scmp.ne.s32.totalorder %s41, %s57
      %p59 = scmp.eq.s32.totalorder %s19, 0
      %p60 = por %p58, %p59
      %s61 = ssub.s32 %s20, %s32
      %s62 = ssub.s32 %s21, %s28
      %s63 = sor.u32 %s61, %s62
      %p64 = scmp.eq.s32.totalorder %s63, 0
      %s66 = sadd.s32 %s65, 1
      %s67 = scalar_select %p64, %s65, %s66
      %p70 = pneg %p64
      %p71 = scmp.eq.s32.totalorder %s13, 1
      %p72 = por %p70, %p71
      %p73 = scmp.ne.s32.totalorder %s65, %s68
      %p74 = scmp.eq.s32.totalorder %s13, 0
      %p75 = por %p73, %p74
      %p76 = scmp.ne.s32.totalorder %s65, %s68
      %p77 = scmp.eq.s32.totalorder %s18, 1
      %p78 = por %p76, %p77
      %p79 = scmp.ne.s32.totalorder %s68, %s69
      %p80 = scmp.eq.s32.totalorder %s18, 0
      %p81 = por %p79, %p80
      %p82 = scmp.ne.s32.totalorder %s68, %s69
      %p83 = scmp.eq.s32.totalorder %s19, 1
      %p84 = por %p82, %p83
      %p86 = scmp.ne.s32.totalorder %s69, %s85
      %p87 = scmp.eq.s32.totalorder %s19, 0
      %p88 = por %p86, %p87
      %p89 = scmp.le.s32.totalorder 1, %s13
      %p90 = scmp.lt.s32.totalorder %s13, 3
      %p91 = pnand %p89, %p90
      %p92 = pneg %p91
      // Predicated region
      $region9: #{tpu_custom_call.1} parent=5 // pred_check
        _
      $region10: #{tpu_custom_call.1} parent=5 // pred_check_branch
        %94 = sbr.rel (%p91) target = $region12
      $region11: #{tpu_custom_call.1} parent=5 // pred_region
        %s95 = ssub.s32 %s13, 1
      $region12: #{tpu_custom_call.1} parent=5 // pred_fallthru
        _
      %p96 = scmp.lt.s32.totalorder %s13, 2
      // Predicated region
      $region13: #{tpu_custom_call.1} parent=5 // pred_check
        %p97 = pneg %p96
      $region14: #{tpu_custom_call.1} parent=5 // pred_check_branch
        %99 = sbr.rel (%p97) target = $region16
      $region15: #{tpu_custom_call.1} parent=5 // pred_region
        // Predicated region
        $region17: #{tpu_custom_call.1} parent=15 // pred_check
          %p100 = pneg %p47
        $region18: #{tpu_custom_call.1} parent=15 // pred_check_branch
          %102 = sbr.rel (%p100) target = $region20
        $region19: #{tpu_custom_call.1} parent=15 // pred_region
          %s103 = sand.u32 %s37, 1
          %s104 = scalar_lea.sflag [#allocation3], %s103
          %s105 = sand.u32 %s37, 1
          %s106 = smul.addr %s105, 32
          %s107 = scalar_lea.vmem [#allocation2], %s106
          %s108 = smul.u32 8, %s20
          %s109 = ssub.s32 2, %s108
          %s110 = smul.u32 64, %s109
          %s112 = ssub.s32 512, %s110
          %113 = vsyncadd %s104, %s112
          %p114 = scmp.ne.s32.totalorder 0, %s110
          %s115 = smul.addr %s108, 2
          %s116 = sadd.s32 %s21, %s115
          %s117 = smul.addr %s116, 64
          %s118 = scalar_lea.hbm %s0, %s117
          %s119 = smul.u32 4, %s109
          %s120 = sshll.u32 %s107, 4
          %s121 = int_to_ptr.vmem [resolvable:$true] %s120
          %s122 = sshll.u32 %s119, 4
          %126 = dma.hbm_to_vmem [thread:$0]  (%p114), %s118, %s122, %s121, %s104, 128, 64, 4
        $region20: #{tpu_custom_call.1} parent=15 // pred_fallthru
          _
      $region16: #{tpu_custom_call.1} parent=5 // pred_fallthru
        _
      %p127 = scmp.le.s32.totalorder 1, %s13
      %p128 = scmp.lt.s32.totalorder %s13, 3
      %p129 = pnand %p127, %p128
      %p130 = pneg %p129
      // Predicated region
      $region21: #{tpu_custom_call.1} parent=5 // pred_check
        _
      $region22: #{tpu_custom_call.1} parent=5 // pred_check_branch
        %132 = sbr.rel (%p129) target = $region24
      $region23: #{tpu_custom_call.1} parent=5 // pred_region
        %s133 = ssub.s32 %s13, 1
        %s134 = sand.u32 %s40, 1
        %s135 = scalar_lea.sflag [#allocation3], %s134
        %s136 = sand.u32 %s40, 1
        %s137 = smul.addr %s136, 32
        %s138 = scalar_lea.vmem [#allocation2], %s137
        // Predicated region
        $region25: #{tpu_custom_call.1} parent=23 // pred_check
          %p139 = pneg %p53
        $region26: #{tpu_custom_call.1} parent=23 // pred_check_branch
          %141 = sbr.rel (%p139) target = $region28
        $region27: #{tpu_custom_call.1} parent=23 // pred_region
          %142 = dma.done %s135, 512
        $region28: #{tpu_custom_call.1} parent=23 // pred_fallthru
          _
        %s143 = sand.u32 %s40, 1
        %s144 = scalar_lea.sflag [#allocation3], %s143
        %s145 = sand.u32 %s40, 1
        %s146 = smul.addr %s145, 32
        %s147 = scalar_lea.vmem [#allocation2], %s146
        %p148 = pneg %p53
        %p149 = pneg %p50
        %p150 = pneg %p81
        %p151 = pneg %p78
        %s152 = sand.u32 %s68, 1
        %s153 = scalar_lea.sflag [#allocation4], %s152
        %s154 = sand.u32 %s68, 1
        %s155 = smul.addr %s154, 8
        %s156 = scalar_lea.vmem [#allocation5], %s155
        %s157 = smul.u32 8, %s22
        %s158 = ssub.s32 2, %s157
        %s159 = smul.u32 64, %s158
        %s160 = smul.u32 4, %s22
        %s161 = ssub.s32 1, %s160
        %s162 = smul.u32 32, %s161
        %v163 = vld [vmem:[%s138] sm:$0xf]
        %v164 = vld [vmem:[%s138 + $0x4] sm:$0xf]
        %v165 = vld [vmem:[%s138 + $0x8] sm:$0xf]
        %v166 = vld [vmem:[%s138 + $0xc] sm:$0xf]
        %v167 = vld [vmem:[%s138 + $0x10] sm:$0xf]
        %v168 = vld [vmem:[%s138 + $0x14] sm:$0xf]
        %v169 = vld [vmem:[%s138 + $0x18] sm:$0xf]
        %v170 = vld [vmem:[%s138 + $0x1c] sm:$0xf]
        %v171 = vmul.f32 %v163, %v163
        %v172 = vmul.f32 %v164, %v164
        %v173 = vmul.f32 %v165, %v165
        %v174 = vmul.f32 %v166, %v166
        %v175 = vmul.f32 %v167, %v167
        %v176 = vmul.f32 %v168, %v168
        %v177 = vmul.f32 %v169, %v169
        %v178 = vmul.f32 %v170, %v170
        %vm179 = vcmask 1043456
        %v180 = vsel %vm179, %v171, 0.0
        %v181 = vrot.slane %v180, 4
        %v182 = vadd.f32 %v180, %v181
        %v183 = vrot.slane %v182, 2
        %v184 = vadd.f32 %v182, %v183
        %v185 = vrot.slane %v184, 1
        %v186 = vadd.f32 %v184, %v185
        %v187 = vsel %vm179, %v172, 0.0
        %v188 = vrot.slane %v187, 4
        %v189 = vadd.f32 %v187, %v188
        %v190 = vrot.slane %v189, 2
        %v191 = vadd.f32 %v189, %v190
        %v192 = vrot.slane %v191, 1
        %v193 = vadd.f32 %v191, %v192
        %v194 = vsel %vm179, %v173, 0.0
        %v195 = vrot.slane %v194, 4
        %v196 = vadd.f32 %v194, %v195
        %v197 = vrot.slane %v196, 2
        %v198 = vadd.f32 %v196, %v197
        %v199 = vrot.slane %v198, 1
        %v200 = vadd.f32 %v198, %v199
        %v201 = vsel %vm179, %v174, 0.0
        %v202 = vrot.slane %v201, 4
        %v203 = vadd.f32 %v201, %v202
        %v204 = vrot.slane %v203, 2
        %v205 = vadd.f32 %v203, %v204
        %v206 = vrot.slane %v205, 1
        %v207 = vadd.f32 %v205, %v206
        %v208 = vsel %vm179, %v175, 0.0
        %v209 = vrot.slane %v208, 4
        %v210 = vadd.f32 %v208, %v209
        %v211 = vrot.slane %v210, 2
        %v212 = vadd.f32 %v210, %v211
        %v213 = vrot.slane %v212, 1
        %v214 = vadd.f32 %v212, %v213
        %v215 = vsel %vm179, %v176, 0.0
        %v216 = vrot.slane %v215, 4
        %v217 = vadd.f32 %v215, %v216
        %v218 = vrot.slane %v217, 2
        %v219 = vadd.f32 %v217, %v218
        %v220 = vrot.slane %v219, 1
        %v221 = vadd.f32 %v219, %v220
        %v222 = vsel %vm179, %v177, 0.0
        %v223 = vrot.slane %v222, 4
        %v224 = vadd.f32 %v222, %v223
        %v225 = vrot.slane %v224, 2
        %v226 = vadd.f32 %v224, %v225
        %v227 = vrot.slane %v226, 1
        %v228 = vadd.f32 %v226, %v227
        %v229 = vsel %vm179, %v178, 0.0
        %v230 = vrot.slane %v229, 4
        %v231 = vadd.f32 %v229, %v230
        %v232 = vrot.slane %v231, 2
        %v233 = vadd.f32 %v231, %v232
        %v234 = vrot.slane %v233, 1
        %v235 = vadd.f32 %v233, %v234
        %v236 = vrsqrt.pop %v186
        %v237 = vmul.f32 %v186, %v236
        %vm238 = vcmp.eq.f32.partialorder %v186, inf
        %v239 = vsel %vm238, %v186, %v237
        %vm240 = vcmp.eq.f32.partialorder %v186, 0.0
        %v241 = vand.u32 %v186, 2147483648
        %v242 = vsel %vm240, %v241, %v239
        %v243 = vrsqrt.pop %v193
        %v244 = vmul.f32 %v193, %v243
        %vm245 = vcmp.eq.f32.partialorder %v193, inf
        %v246 = vsel %vm245, %v193, %v244
        %vm247 = vcmp.eq.f32.partialorder %v193, 0.0
        %v248 = vand.u32 %v193, 2147483648
        %v249 = vsel %vm247, %v248, %v246
        %v250 = vrsqrt.pop %v200
        %v251 = vmul.f32 %v200, %v250
        %vm252 = vcmp.eq.f32.partialorder %v200, inf
        %v253 = vsel %vm252, %v200, %v251
        %vm254 = vcmp.eq.f32.partialorder %v200, 0.0
        %v255 = vand.u32 %v200, 2147483648
        %v256 = vsel %vm254, %v255, %v253
        %v257 = vrsqrt.pop %v207
        %v258 = vmul.f32 %v207, %v257
        %vm259 = vcmp.eq.f32.partialorder %v207, inf
        %v260 = vsel %vm259, %v207, %v258
        %vm261 = vcmp.eq.f32.partialorder %v207, 0.0
        %v262 = vand.u32 %v207, 2147483648
        %v263 = vsel %vm261, %v262, %v260
        %v264 = vrsqrt.pop %v214
        %v265 = vmul.f32 %v214, %v264
        %vm266 = vcmp.eq.f32.partialorder %v214, inf
        %v267 = vsel %vm266, %v214, %v265
        %vm268 = vcmp.eq.f32.partialorder %v214, 0.0
        %v269 = vand.u32 %v214, 2147483648
        %v270 = vsel %vm268, %v269, %v267
        %v271 = vrsqrt.pop %v221
        %v272 = vmul.f32 %v221, %v271
        %vm273 = vcmp.eq.f32.partialorder %v221, inf
        %v274 = vsel %vm273, %v221, %v272
        %vm275 = vcmp.eq.f32.partialorder %v221, 0.0
        %v276 = vand.u32 %v221, 2147483648
        %v277 = vsel %vm275, %v276, %v274
        %v278 = vrsqrt.pop %v228
        %v279 = vmul.f32 %v228, %v278
        %vm280 = vcmp.eq.f32.partialorder %v228, inf
        %v281 = vsel %vm280, %v228, %v279
        %vm282 = vcmp.eq.f32.partialorder %v228, 0.0
        %v283 = vand.u32 %v228, 2147483648
        %v284 = vsel %vm282, %v283, %v281
        %v285 = vrsqrt.pop %v235
        %v286 = vmul.f32 %v235, %v285
        %vm287 = vcmp.eq.f32.partialorder %v235, inf
        %v288 = vsel %vm287, %v235, %v286
        %vm289 = vcmp.eq.f32.partialorder %v235, 0.0
        %v290 = vand.u32 %v235, 2147483648
        %v291 = vsel %vm289, %v290, %v288
        %vm300 = vcmask 1041409
        %v301 = vsel %vm300, %v249, %v242
        %vm302 = vcmask 1042434
        %v303 = vsel %vm302, %v256, %v301
        %vm304 = vcmask 1043459
        %v305 = vsel %vm304, %v263, %v303
        %vm306 = vcmask 1044484
        %v307 = vsel %vm306, %v270, %v305
        %vm308 = vcmask 1045509
        %v309 = vsel %vm308, %v277, %v307
        %vm310 = vcmask 1046534
        %v311 = vsel %vm310, %v284, %v309
        %vm312 = vcmask 1047559
        %v313 = vsel %vm312, %v291, %v311
        %315 = vst [vmem:[%s156] sm:$0xff] %v313
        %s316 = sand.u32 %s68, 1
        %s317 = scalar_lea.sflag [#allocation4], %s316
        %s318 = sand.u32 %s68, 1
        %s319 = smul.addr %s318, 8
        %s320 = scalar_lea.vmem [#allocation5], %s319
        // Predicated region
        $region29: #{tpu_custom_call.1} parent=23 // pred_check
          %p321 = pneg %p78
        $region30: #{tpu_custom_call.1} parent=23 // pred_check_branch
          %323 = sbr.rel (%p321) target = $region32
        $region31: #{tpu_custom_call.1} parent=23 // pred_region
          %s324 = smul.u32 4, %s22
          %s325 = ssub.s32 1, %s324
          %s326 = smul.u32 32, %s325
          %s328 = ssub.s32 128, %s326
          %329 = vsyncadd %s317, %s328
          %p330 = scmp.ne.s32.totalorder 0, %s326
          %s331 = smul.addr %s324, 2
          %s332 = sadd.s32 %s23, %s331
          %s333 = smul.addr %s332, 32
          %s334 = scalar_lea.hbm %s1, %s333
          %s335 = smul.u32 2, %s325
          %s336 = sshll.u32 %s320, 4
          %s337 = int_to_ptr.vmem [resolvable:$true] %s336
          %s338 = sshll.u32 %s335, 4
          %342 = dma.vmem_to_hbm [thread:$0]  (%p330), %s337, %s338, %s334, %s317, 32, 64, 2
        $region32: #{tpu_custom_call.1} parent=23 // pred_fallthru
          _
      $region24: #{tpu_custom_call.1} parent=5 // pred_fallthru
        _
      %p343 = scmp.le.s32.totalorder 2, %s13
      // Predicated region
      $region33: #{tpu_custom_call.1} parent=5 // pred_check
        %p344 = pneg %p343
      $region34: #{tpu_custom_call.1} parent=5 // pred_check_branch
        %346 = sbr.rel (%p344) target = $region36
      $region35: #{tpu_custom_call.1} parent=5 // pred_region
        %s347 = ssub.s32 %s13, 2
        // Predicated region
        $region37: #{tpu_custom_call.1} parent=35 // pred_check
          %p348 = pneg %p84
        $region38: #{tpu_custom_call.1} parent=35 // pred_check_branch
          %350 = sbr.rel (%p348) target = $region40
        $region39: #{tpu_custom_call.1} parent=35 // pred_region
          %s351 = sand.u32 %s69, 1
          %s352 = scalar_lea.sflag [#allocation4], %s351
          %s353 = sand.u32 %s69, 1
          %s354 = smul.addr %s353, 8
          %s355 = scalar_lea.vmem [#allocation5], %s354
          %356 = dma.done %s352, 128
        $region40: #{tpu_custom_call.1} parent=35 // pred_fallthru
          _
      $region36: #{tpu_custom_call.1} parent=5 // pred_fallthru
        _
    $region6: #{tpu_custom_call.1} parent=1 // loop_footer
      %s17 = sadd.s32 1, %s13
    $region7: #{tpu_custom_call.1} parent=1 // loop_footer_branch
      %12 = sbr.rel target = $region3
    $region8: #{tpu_custom_call.1} parent=1 // loop_exit
      _
    %357 = vsyncpa [#allocation3], 1
    %s358 = scalar_lea.sflag [#allocation3], 1
    %359 = vsyncpa %s358, 1
    %360 = vsyncpa [#allocation4], 1
    %s361 = scalar_lea.sflag [#allocation4], 1
    %362 = vsyncpa %s361, 1

</llo_original>
